<compile_context>
chip_gen: v6e
topology: v6e:2x2x1
jax: 0.10.0
libtpu: 0.0.40
codegen_flags: <defaults>
</compile_context>

<pallas_src>
import functools

import jax
import jax.numpy as jnp
import numpy as np
from jax.experimental import pallas as pl
from jax.experimental.pallas import tpu as pltpu

MLP_HIDDEN = 64  # fixed by the module: Linear(in, 64) -> Tanh -> Linear(64, H)


# ---------------------------------------------------------------------------
# Shared packed layout (input slab lanes / weight slab rows, all 8-aligned).
# ---------------------------------------------------------------------------
def _layout(hidden_dim, static_dim, n_inj):
    H, S, N = hidden_dim, static_dim, n_inj
    k_in = H + S + 2 * N                 # [state | static | times | doses]
    k_pad = -(-k_in // 8) * 8            # 8-aligned input-slab lane count
    tail_row = k_pad                     # dose / sin / cos / b1 broadcast rows
    w2_row = k_pad + 8                   # W2 rows (8-aligned start)
    b2_row = w2_row + MLP_HIDDEN         # b2 row (8-aligned start)
    rows = -(-(b2_row + 1) // 8) * 8     # padded weight-slab height
    return k_in, k_pad, tail_row, w2_row, b2_row, rows


def pack_odef_params(params, hidden_dim, static_dim, n_inj):
    """Pack W1/b1/W2/b2 into one 8-aligned (rows, 64) slab. Call ONCE per solve."""
    H, S = hidden_dim, static_dim
    _, k_pad, tail_row, w2_row, b2_row, rows = _layout(H, S, n_inj)
    W1 = jnp.asarray(params["W1"], jnp.float32)          # (H+S+3, 64)
    b1 = jnp.asarray(params["b1"], jnp.float32)          # (64,)
    W2 = jnp.asarray(params["W2"], jnp.float32)          # (64, H)
    b2 = jnp.asarray(params["b2"], jnp.float32)          # (H,)
    slab = jnp.zeros((rows, MLP_HIDDEN), jnp.float32)
    slab = slab.at[0:H + S, :].set(W1[0:H + S, :])        # matmul rows (state|static)
    slab = slab.at[tail_row + 0, :].set(W1[H + S + 0, :])  # dose-effect row
    slab = slab.at[tail_row + 1, :].set(W1[H + S + 1, :])  # sin row
    slab = slab.at[tail_row + 2, :].set(W1[H + S + 2, :])  # cos row
    slab = slab.at[tail_row + 3, :].set(b1)                # b1 row
    slab = slab.at[w2_row:w2_row + MLP_HIDDEN, 0:H].set(W2)
    slab = slab.at[b2_row, 0:H].set(b2)
    return slab


def pack_odef_inputs(state, static_embed, injection_times, injection_doses):
    """Pack per-batch tensors into one (B, k_pad) slab -> a single input DMA."""
    H, S, N = state.shape[1], static_embed.shape[1], injection_times.shape[1]
    k_in, k_pad, *_ = _layout(H, S, N)
    x = jnp.concatenate(
        [state, static_embed, injection_times, injection_doses],
        axis=1).astype(jnp.float32)
    if k_pad > k_in:
        x = jnp.pad(x, ((0, 0), (0, k_pad - k_in)))
    return x


# ---------------------------------------------------------------------------
# Kernel bodies.
# ---------------------------------------------------------------------------
def _odef_deriv(t, x, w_ref, neg_abs_decay, *, sigma, hidden_dim, static_dim,
                n_inj, k_pad):
    """d(state)/dt for the packed input slab x (B, k_pad) and weight slab ref."""
    H, S, N = hidden_dim, static_dim, n_inj
    tail_row = k_pad
    w2_row = k_pad + 8
    b2_row = w2_row + MLP_HIDDEN

    state = x[:, 0:H]
    times = x[:, H + S:H + S + N]
    doses = x[:, H + S + N:H + S + 2 * N]

    # Dose effect: divide folded into a compile-time constant multiply.
    neg_inv_2s2 = -1.0 / (2.0 * float(sigma) * float(sigma))
    diff = t - times
    dose_effect = jnp.sum(doses * jnp.exp((diff * diff) * neg_inv_2s2),
                          axis=1, keepdims=True)          # (B, 1)

    # Time embedding (exact divide; approx reciprocal would break tolerance).
    if N >= 2:
        period = times[:, 1:2] - times[:, 0:1]            # (B, 1)
    else:
        period = jnp.ones_like(state[:, 0:1])
    phase = (2.0 * np.pi) * t / period
    te_sin = jnp.sin(phase)
    te_cos = jnp.cos(phase)

    # Linear1: ONE MXU dot over the whole packed slab (times/doses lanes hit
    # zero weight rows -> exact), plus 8-aligned broadcast rows.
    h = jnp.dot(x, w_ref[0:k_pad, :], preferred_element_type=jnp.float32)
    tail = w_ref[tail_row:tail_row + 8, :]                # aligned (8, 64) load
    h = (h
         + dose_effect * tail[0:1, :]
         + te_sin * tail[1:2, :]
         + te_cos * tail[2:3, :]
         + tail[3:4, :])                                  # b1 row
    h = jnp.tanh(h)

    # Linear2 (+ bias row) + decay.
    out = (jnp.dot(h, w_ref[w2_row:w2_row + MLP_HIDDEN, 0:H],
                   preferred_element_type=jnp.float32)
           + w_ref[b2_row:b2_row + 1, 0:H]
           + neg_abs_decay * state)
    return out                                            # (B, H)


def odef_kernel(scalars_ref, x_ref, w_ref, out_ref, *, sigma, hidden_dim,
                static_dim, n_inj, k_pad):
    """Single evaluation of ODEF.forward. scalars = [t, decay_param] (SMEM)."""
    t = scalars_ref[0]
    neg_abs_decay = -jnp.abs(scalars_ref[1])
    out = _odef_deriv(t, x_ref[...], w_ref, neg_abs_decay, sigma=sigma,
                      hidden_dim=hidden_dim, static_dim=static_dim,
                      n_inj=n_inj, k_pad=k_pad)
    out_ref[...] = out.astype(out_ref.dtype)


def odef_euler_kernel(scalars_ref, x_ref, w_ref, out_ref, slab_sc, *, sigma,
                      hidden_dim, static_dim, n_inj, k_pad):
    """One Euler step per grid iteration; state carried in VMEM scratch.

    scalars = [t0, dt, decay_param] (SMEM). Weights / constant input slab have
    constant index_maps, so they are fetched once and stay resident in VMEM.
    """
    H = hidden_dim
    step = pl.program_id(0)

    @pl.when(step == 0)
    def _():
        slab_sc[...] = x_ref[...]          # seed the carried slab with step-0 state

    t0 = scalars_ref[0]
    dt = scalars_ref[1]
    neg_abs_decay = -jnp.abs(scalars_ref[2])
    t = t0 + dt * step.astype(jnp.float32)

    x = slab_sc[...]
    deriv = _odef_deriv(t, x, w_ref, neg_abs_decay, sigma=sigma,
                        hidden_dim=hidden_dim, static_dim=static_dim,
                        n_inj=n_inj, k_pad=k_pad)
    new_state = x[:, 0:H] + dt * deriv
    slab_sc[:, 0:H] = new_state            # carry state across grid iterations
    out_ref[...] = new_state.astype(out_ref.dtype)


# ---------------------------------------------------------------------------
# Wrappers.
# ---------------------------------------------------------------------------
def odef_forward(t, state, static_embed, injection_times, injection_doses,
                 params, sigma=0.001, *, packed_w=None):
    """Pallas-backed ODEF.forward (single evaluation)."""
    B, H = state.shape
    S = static_embed.shape[1]
    N = injection_times.shape[1]
    _, k_pad, _, _, _, rows = _layout(H, S, N)
    if packed_w is None:                    # pre-pack once outside hot loops
        packed_w = pack_odef_params(params, H, S, N)
    x = pack_odef_inputs(state, static_embed, injection_times, injection_doses)
    scalars = jnp.stack([
        jnp.asarray(t, jnp.float32).reshape(()),
        jnp.asarray(params["decay_param"], jnp.float32).reshape(()),
    ])                                      # (2,) in SMEM

    kernel = functools.partial(odef_kernel, sigma=float(sigma), hidden_dim=H,
                               static_dim=S, n_inj=N, k_pad=k_pad)
    cost = pl.CostEstimate(
        flops=2 * B * (k_pad * MLP_HIDDEN + MLP_HIDDEN * H),
        transcendentals=B * (N + 2 + MLP_HIDDEN),
        bytes_accessed=4 * (B * k_pad + rows * MLP_HIDDEN + B * H + 2))

    vmem = pl.BlockSpec(memory_space=pltpu.MemorySpace.VMEM)
    smem = pl.BlockSpec(memory_space=pltpu.MemorySpace.SMEM)
    return pl.pallas_call(
        kernel,
        out_shape=jax.ShapeDtypeStruct((B, H), jnp.float32),
        in_specs=[smem, vmem, vmem],
        out_specs=vmem,
        cost_estimate=cost,
    )(scalars, x, packed_w)


def odef_euler_integrate(t0, dt, n_steps, state, static_embed, injection_times,
                         injection_doses, params, sigma=0.001, *, packed_w=None):
    """Fused explicit-Euler integration of the ODEF dynamics in ONE pallas_call.

    Returns the final state (B, H) after n_steps steps of size dt from t0.
    """
    B, H = state.shape
    S = static_embed.shape[1]
    N = injection_times.shape[1]
    _, k_pad, _, _, _, rows = _layout(H, S, N)
    if packed_w is None:
        packed_w = pack_odef_params(params, H, S, N)
    x = pack_odef_inputs(state, static_embed, injection_times, injection_doses)
    scalars = jnp.stack([
        jnp.asarray(t0, jnp.float32).reshape(()),
        jnp.asarray(dt, jnp.float32).reshape(()),
        jnp.asarray(params["decay_param"], jnp.float32).reshape(()),
    ])                                      # (3,) in SMEM

    kernel = functools.partial(odef_euler_kernel, sigma=float(sigma),
                               hidden_dim=H, static_dim=S, n_inj=N, k_pad=k_pad)
    cost = pl.CostEstimate(
        flops=2 * B * (k_pad * MLP_HIDDEN + MLP_HIDDEN * H) * int(n_steps),
        transcendentals=B * (N + 2 + MLP_HIDDEN) * int(n_steps),
        bytes_accessed=4 * (B * k_pad + rows * MLP_HIDDEN + B * H + 3))

    return pl.pallas_call(
        kernel,
        out_shape=jax.ShapeDtypeStruct((B, H), jnp.float32),
        grid=(int(n_steps),),
        in_specs=[
            pl.BlockSpec(memory_space=pltpu.MemorySpace.SMEM),       # scalars
            pl.BlockSpec((B, k_pad), lambda i: (0, 0)),              # const slab
            pl.BlockSpec((rows, MLP_HIDDEN), lambda i: (0, 0)),      # weights
        ],
        out_specs=pl.BlockSpec((B, H), lambda i: (0, 0)),
        scratch_shapes=[pltpu.VMEM((B, k_pad), jnp.float32)],        # carried state
        compiler_params=pltpu.CompilerParams(
            dimension_semantics=("arbitrary",)),
        cost_estimate=cost,
    )(scalars, x, packed_w)


# ---------------------------------------------------------------------------
# Pure-JAX references (mirror the PyTorch forward exactly) + param init.
# ---------------------------------------------------------------------------
def odef_reference(t, state, static_embed, injection_times, injection_doses,
                   params, sigma=0.001):
    W1, b1, W2, b2 = params["W1"], params["b1"], params["W2"], params["b2"]
    decay_param = params["decay_param"]
    B = state.shape[0]
    dose_effect = (injection_doses *
                   jnp.exp(-(t - injection_times) ** 2 / (2 * sigma ** 2)))
    dose_effect = dose_effect.sum(axis=1, keepdims=True)
    decay = -jnp.abs(decay_param) * state
    t_expanded = jnp.broadcast_to(t, (B,))
    if injection_times.shape[1] >= 2:
        period = injection_times[:, 1] - injection_times[:, 0]
    else:
        period = jnp.ones((B,), dtype=state.dtype)
    te_sin = jnp.sin(2 * np.pi * t_expanded / period)[:, None]
    te_cos = jnp.cos(2 * np.pi * t_expanded / period)[:, None]
    inp = jnp.concatenate([state, static_embed, dose_effect, te_sin, te_cos],
                          axis=-1)
    return jnp.tanh(inp @ W1 + b1) @ W2 + b2 + decay


def init_params(key, hidden_dim, static_dim, dose_dim=1):
    in_dim = hidden_dim + static_dim + dose_dim + 2
    k1, k2, k3, k4 = jax.random.split(key, 4)
    lim1 = 1.0 / np.sqrt(in_dim)
    lim2 = 1.0 / np.sqrt(MLP_HIDDEN)
    return {
        "decay_param": jnp.float32(0.01),
        "W1": jax.random.uniform(k1, (in_dim, MLP_HIDDEN), jnp.float32, -lim1, lim1),
        "b1": jax.random.uniform(k2, (MLP_HIDDEN,), jnp.float32, -lim1, lim1),
        "W2": jax.random.uniform(k3, (MLP_HIDDEN, hidden_dim), jnp.float32, -lim2, lim2),
        "b2": jax.random.uniform(k4, (hidden_dim,), jnp.float32, -lim2, lim2),
    }


if __name__ == "__main__":
    hidden_dim, static_dim, n_inj, batch = 32, 6, 4, 8

    key = jax.random.PRNGKey(0)
    kp, ks, kst, kj, kd = jax.random.split(key, 5)

    params = init_params(kp, hidden_dim, static_dim)

    state = jax.random.normal(ks, (batch, hidden_dim), jnp.float32)
    static_embed = jax.random.normal(kst, (batch, static_dim), jnp.float32)
    # Injection schedule: per-patient start + regular spacing (+ tiny jitter),
    # so period = times[:,1] - times[:,0] is well defined (non-zero).
    base = 0.1 + 0.25 * jnp.arange(n_inj, dtype=jnp.float32)[None, :]
    injection_times = base + 0.01 * jax.random.normal(kj, (batch, n_inj), jnp.float32)
    injection_doses = jax.nn.softplus(
        jax.random.normal(kd, (batch, n_inj), jnp.float32))

    # Pack the weight slab ONCE; reused by every evaluation below.
    packed_w = pack_odef_params(params, hidden_dim, static_dim, n_inj)

    # 1) Single forward evaluation (== ODEF.forward).
    t = jnp.float32(0.35)
    out = odef_forward(t, state, static_embed, injection_times,
                       injection_doses, params, packed_w=packed_w)
    out = jax.block_until_ready(out)
    ref = odef_reference(t, state, static_embed, injection_times,
                         injection_doses, params)
    np.testing.assert_allclose(np.asarray(out), np.asarray(ref),
                               rtol=1e-5, atol=1e-5)

    # 2) Fused Euler integration: the whole solver loop in one pallas_call.
    t0, dt, n_steps = jnp.float32(0.3), jnp.float32(0.02), 16
    fused = odef_euler_integrate(t0, dt, n_steps, state, static_embed,
                                 injection_times, injection_doses, params,
                                 packed_w=packed_w)
    fused = jax.block_until_ready(fused)
    s_ref = state
    for k in range(n_steps):
        tk = t0 + dt * jnp.float32(k)
        s_ref = s_ref + dt * odef_reference(tk, s_ref, static_embed,
                                            injection_times, injection_doses,
                                            params)
    np.testing.assert_allclose(np.asarray(fused), np.asarray(s_ref),
                               rtol=1e-4, atol=1e-5)

    print("KERNEL_OK")
</pallas_src>

<mosaic_0001>
module attributes {stable_mosaic.version = 11 : i64} {
  func.func @odef_kernel(%arg0: memref<2xf32, #tpu.memory_space<smem>>, %arg1: memref<8x48xf32, #tpu.memory_space<vmem>>, %arg2: memref<128x64xf32, #tpu.memory_space<vmem>>, %arg3: memref<8x32xf32, #tpu.memory_space<vmem>>) attributes {dimension_semantics = [], scalar_prefetch = 0 : i64, scratch_operands = 0 : i64, tpu.core_type = #tpu.core_type<tc>} {
    %c0 = arith.constant 0 : index
    %0 = memref.load %arg0[%c0] : memref<2xf32, #tpu.memory_space<smem>>
    %c1 = arith.constant 1 : index
    %1 = memref.load %arg0[%c1] : memref<2xf32, #tpu.memory_space<smem>>
    %2 = math.absf %1 : f32
    %cst = arith.constant 0.000000e+00 : f32
    %3 = arith.subf %cst, %2 : f32
    %c0_0 = arith.constant 0 : index
    %c0_1 = arith.constant 0 : index
    %4 = vector.load %arg1[%c0_0, %c0_1] : memref<8x48xf32, #tpu.memory_space<vmem>>, vector<8x48xf32>
    %5 = vector.extract_strided_slice %4 {offsets = [0, 0], sizes = [8, 32], strides = [1, 1]} : vector<8x48xf32> to vector<8x32xf32>
    %6 = vector.extract_strided_slice %4 {offsets = [0, 38], sizes = [8, 4], strides = [1, 1]} : vector<8x48xf32> to vector<8x4xf32>
    %7 = vector.extract_strided_slice %4 {offsets = [0, 42], sizes = [8, 4], strides = [1, 1]} : vector<8x48xf32> to vector<8x4xf32>
    %8 = vector.broadcast %0 : f32 to vector<8x4xf32>
    %9 = arith.subf %8, %6 : vector<8x4xf32>
    %10 = arith.mulf %9, %9 : vector<8x4xf32>
    %cst_2 = arith.constant -5.000000e+05 : f32
    %11 = vector.broadcast %cst_2 : f32 to vector<8x4xf32>
    %12 = arith.mulf %10, %11 : vector<8x4xf32>
    %13 = math.exp %12 : vector<8x4xf32>
    %14 = arith.mulf %7, %13 : vector<8x4xf32>
    %cst_3 = arith.constant dense<0.000000e+00> : vector<8xf32>
    %15 = vector.multi_reduction <add>, %14, %cst_3 [1] : vector<8x4xf32> to vector<8xf32>
    %16 = vector.shape_cast %15 : vector<8xf32> to vector<8x1xf32>
    %17 = vector.extract_strided_slice %6 {offsets = [0, 1], sizes = [8, 1], strides = [1, 1]} : vector<8x4xf32> to vector<8x1xf32>
    %18 = vector.extract_strided_slice %6 {offsets = [0, 0], sizes = [8, 1], strides = [1, 1]} : vector<8x4xf32> to vector<8x1xf32>
    %19 = arith.subf %17, %18 : vector<8x1xf32>
    %cst_4 = arith.constant 6.28318548 : f32
    %20 = arith.mulf %cst_4, %0 : f32
    %21 = vector.broadcast %20 : f32 to vector<8x1xf32>
    %22 = arith.divf %21, %19 : vector<8x1xf32>
    %23 = math.sin %22 : vector<8x1xf32>
    %24 = math.cos %22 : vector<8x1xf32>
    %c0_5 = arith.constant 0 : index
    %c0_6 = arith.constant 0 : index
    %25 = vector.load %arg2[%c0_5, %c0_6] : memref<128x64xf32, #tpu.memory_space<vmem>>, vector<48x64xf32>
    %cst_7 = arith.constant dense<0.000000e+00> : vector<8x64xf32>
    %26 = tpu.matmul %4, %25, %cst_7 {dimension_numbers = #tpu.dot_dimension_numbers<[1], [0], [0], [1], [0, 0, 1, 1], [], []>} : vector<8x48xf32>, vector<48x64xf32>, vector<8x64xf32> -> vector<8x64xf32>
    %c48 = arith.constant 48 : index
    %c0_8 = arith.constant 0 : index
    %27 = vector.load %arg2[%c48, %c0_8] : memref<128x64xf32, #tpu.memory_space<vmem>>, vector<8x64xf32>
    %28 = vector.extract_strided_slice %27 {offsets = [0, 0], sizes = [1, 64], strides = [1, 1]} : vector<8x64xf32> to vector<1x64xf32>
    %29 = vector.broadcast %16 : vector<8x1xf32> to vector<8x64xf32>
    %30 = vector.broadcast %28 : vector<1x64xf32> to vector<8x64xf32>
    %31 = arith.mulf %29, %30 : vector<8x64xf32>
    %32 = arith.addf %26, %31 : vector<8x64xf32>
    %33 = vector.extract_strided_slice %27 {offsets = [1, 0], sizes = [1, 64], strides = [1, 1]} : vector<8x64xf32> to vector<1x64xf32>
    %34 = vector.broadcast %23 : vector<8x1xf32> to vector<8x64xf32>
    %35 = vector.broadcast %33 : vector<1x64xf32> to vector<8x64xf32>
    %36 = arith.mulf %34, %35 : vector<8x64xf32>
    %37 = arith.addf %32, %36 : vector<8x64xf32>
    %38 = vector.extract_strided_slice %27 {offsets = [2, 0], sizes = [1, 64], strides = [1, 1]} : vector<8x64xf32> to vector<1x64xf32>
    %39 = vector.broadcast %24 : vector<8x1xf32> to vector<8x64xf32>
    %40 = vector.broadcast %38 : vector<1x64xf32> to vector<8x64xf32>
    %41 = arith.mulf %39, %40 : vector<8x64xf32>
    %42 = arith.addf %37, %41 : vector<8x64xf32>
    %43 = vector.extract_strided_slice %27 {offsets = [3, 0], sizes = [1, 64], strides = [1, 1]} : vector<8x64xf32> to vector<1x64xf32>
    %44 = vector.broadcast %43 : vector<1x64xf32> to vector<8x64xf32>
    %45 = arith.addf %42, %44 : vector<8x64xf32>
    %46 = math.tanh %45 : vector<8x64xf32>
    %c56 = arith.constant 56 : index
    %c0_9 = arith.constant 0 : index
    %47 = vector.load %arg2[%c56, %c0_9] : memref<128x64xf32, #tpu.memory_space<vmem>>, vector<64x32xf32>
    %cst_10 = arith.constant dense<0.000000e+00> : vector<8x32xf32>
    %48 = tpu.matmul %46, %47, %cst_10 {dimension_numbers = #tpu.dot_dimension_numbers<[1], [0], [0], [1], [0, 0, 1, 1], [], []>} : vector<8x64xf32>, vector<64x32xf32>, vector<8x32xf32> -> vector<8x32xf32>
    %c120 = arith.constant 120 : index
    %c0_11 = arith.constant 0 : index
    %49 = vector.load %arg2[%c120, %c0_11] : memref<128x64xf32, #tpu.memory_space<vmem>>, vector<1x32xf32>
    %50 = vector.broadcast %49 : vector<1x32xf32> to vector<8x32xf32>
    %51 = arith.addf %48, %50 : vector<8x32xf32>
    %52 = vector.broadcast %3 : f32 to vector<8x32xf32>
    %53 = arith.mulf %52, %5 : vector<8x32xf32>
    %54 = arith.addf %51, %53 : vector<8x32xf32>
    %c0_12 = arith.constant 0 : index
    %c0_13 = arith.constant 0 : index
    %55 = vector.load %arg3[%c0_12, %c0_13] : memref<8x32xf32, #tpu.memory_space<vmem>>, vector<8x32xf32>
    tpu.vector_store %arg3[%c0_12, %c0_13], %54 {strides = array<i32>} : memref<8x32xf32, #tpu.memory_space<vmem>>, vector<8x32xf32>,
    return
  }
}

</mosaic_0001>

<llo_original>
// kernel: tpu_custom_call.1
$region0: #{tpu_custom_call.1}
  #allocation0 [shape = 'u32[]', space=smem, size = 0x4, offset = 0x4, fixed_abs, tag = 'smem constant byte address 0x4 - core index']
  #allocation1 [shape = 'u32[144,128]{1,0:T(1,128)}', space=vmem, size = 0x12000, scoped, tag = 'internal scratch']
  %s0 = inlined_call_operand.vmem [shape: f32[2], index: 0, kind: input, shape index: {}]
  %s1 = inlined_call_operand.vmem [shape: f32[8,48], index: 1, kind: input, shape index: {}]
  %s2 = inlined_call_operand.vmem [shape: f32[128,64], index: 2, kind: input, shape index: {}]
  %s3 = inlined_call_operand.hbm [shape: f32[8,32], index: 3, kind: output, shape index: {}]
  %s4 = sld [smem:[#allocation0]]
  $region26: #{tpu_custom_call.1} parent=0
    _
  %s6 = ssub.s32 1, %s4
  %s7 = scalar_select 0, %s6, %s4
  $region1: #{tpu_custom_call.1} parent=0
    #allocation2 [shape = 'u8[512]{0}', space=smem, size = 0x200, scoped, tag = 'input window, operand 0, single buffered']
    #allocation3 [shape = 's32[1]{0}', space=sflag, size = 0x4, scoped, tag = 'scoped memory for tpu_custom_call.1']
    #allocation4 [shape = 's32[1]{0}', space=sflag, size = 0x4, scoped, tag = 'scoped memory for tpu_custom_call.1']
    #allocation5 [shape = 'u8[4096]{0}', space=vmem, size = 0x1000, scoped, tag = 'output window, operand 0, single buffered']
    %8 = vsyncpa [#allocation4], 0
    %9 = vsyncpa [#allocation3], 0
    // Predicated region
    $region2: #{tpu_custom_call.1} parent=1 // pred_check
      _
    $region3: #{tpu_custom_call.1} parent=1 // pred_check_branch
      %11 = sbr.rel (0) target = $region5
    $region4: #{tpu_custom_call.1} parent=1 // pred_region
      %s13 = ssub.s32 16, 16
      %14 = vsyncadd [#allocation4], %s13
      %s16 = sshll.u32 %s0, 4
      %s17 = int_to_ptr.vmem [resolvable:$true] %s16
      %19 = dma.vmem_to_smem %s17, 16, [#allocation2], [#allocation4]
    $region5: #{tpu_custom_call.1} parent=1 // pred_fallthru
      _
    // Predicated region
    $region6: #{tpu_custom_call.1} parent=1 // pred_check
      _
    $region7: #{tpu_custom_call.1} parent=1 // pred_check_branch
      %21 = sbr.rel (0) target = $region9
    $region8: #{tpu_custom_call.1} parent=1 // pred_region
      _
    $region9: #{tpu_custom_call.1} parent=1 // pred_fallthru
      _
    // Predicated region
    $region10: #{tpu_custom_call.1} parent=1 // pred_check
      _
    $region11: #{tpu_custom_call.1} parent=1 // pred_check_branch
      %23 = sbr.rel (0) target = $region13
    $region12: #{tpu_custom_call.1} parent=1 // pred_region
      _
    $region13: #{tpu_custom_call.1} parent=1 // pred_fallthru
      _
    // Predicated region
    $region14: #{tpu_custom_call.1} parent=1 // pred_check
      _
    $region15: #{tpu_custom_call.1} parent=1 // pred_check_branch
      %25 = sbr.rel (0) target = $region17
    $region16: #{tpu_custom_call.1} parent=1 // pred_region
      %26 = dma.done [#allocation4], 16
    $region17: #{tpu_custom_call.1} parent=1 // pred_fallthru
      _
    %27 = sfence
    %s28 = sld [smem:[#allocation2]]
    %s29 = sld [smem:[#allocation2 + $0x1]]
    %s30 = sand.u32 2147483647, %s29
    %s31 = ssub.f32 0.0, %s30
    %v32 = vld [vmem:[%s1] sm:$0xff]
    %v33 = vstv %s28
    %v34 = vsub.f32 %v33, %v32
    %v35 = vmul.f32 %v34, %v34
    %v36 = vmul.f32 %v35, -500000.0
    %v37 = vmul.f32 %v36, 1.442695
    %v38 = vpow.pop %v37
    %40 = vrot.lane.b32.xlu0 %v38, 4
    %v41 = vpop.permute.xlu0 %40
    %v43 = vmul.f32 %v32, %v41
    %45 = vrot.lane.b32.xlu0 %v43, 86
    %v46 = vpop.permute.xlu0 %45
    %vm48 = vcmask 31744
    %v49 = vsel %vm48, %v46, 0.0
    %50 = vadd.xlane.f32.xlu0 %v49
    %v51 = vpop.xlane.xlu0 %50
    %53 = vrot.lane.b32.xlu0 %v32, 1
    %v54 = vpop.permute.xlu0 %53
    %v56 = vsub.f32 %v32, %v54
    %s57 = smul.f32 %s28, 6.2831855
    %v58 = vstv %s57
    %v59 = vrcp.pop %v56
    %v60 = vmul.f32 %v58, %v59
    %v61 = vand.u32 2147483647, %v60
    %vm62 = vcmp.le.f32.partialorder %v61, 0.7853982
    %vm63 = vcmp.lt.s32.totalorder %v60, 0
    %v64 = vand.u32 %v60, 2139095040
    %v65 = vshrl.u32 %v64, 23
    %v66 = vsub.s32 %v65, 127
    %v67 = vand.u32 2147483647, %v60
    %v68 = vand.u32 %v67, 8388607
    %v69 = vor.u32 %v68, 8388608
    %v70 = vsub.s32 0, %v69
    %v71 = vadd.s32 %v66, 1
    %vm72 = vcmp.gt.s32.totalorder %v71, 0
    %v73 = vsel %vm72, %v71, 0
    %v74 = vshrl.u32 %v73, 5
    %v75 = vand.u32 %v73, 31
    %v76 = vsub.s32 32, %v75
    %v77 = vshrl.u32 683565275, %v76
    %v78 = vshll.u32 683565275, %v75
    %v79 = vshrl.u32 2475754826, %v76
    %v80 = vor.u32 %v78, %v79
    %v81 = vshll.u32 2475754826, %v75
    %v82 = vshrl.u32 2131351028, %v76
    %v83 = vor.u32 %v81, %v82
    %v84 = vshll.u32 2131351028, %v75
    %v85 = vshrl.u32 2102212464, %v76
    %v86 = vor.u32 %v84, %v85
    %v87 = vshll.u32 2102212464, %v75
    %v88 = vshrl.u32 920167782, %v76
    %v89 = vor.u32 %v87, %v88
    %v90 = vshll.u32 920167782, %v75
    %v91 = vshrl.u32 1326507024, %v76
    %v92 = vor.u32 %v90, %v91
    %vm93 = vcmp.lt.s32.totalorder %v74, 1
    %vm94 = vcmp.lt.s32.totalorder %v74, 2
    %vm95 = vcmp.lt.s32.totalorder %v74, 3
    %vm96 = vcmp.lt.s32.totalorder %v74, 4
    %v97 = vsel %vm93, %v77, %v80
    %v98 = vsel %vm96, %v86, 2102212464
    %v99 = vsel %vm95, %v83, %v98
    %v100 = vsel %vm94, %v97, %v99
    %v101 = vsel %vm93, %v80, %v83
    %v102 = vsel %vm96, %v89, 920167782
    %v103 = vsel %vm95, %v86, %v102
    %v104 = vsel %vm94, %v101, %v103
    %v105 = vsel %vm93, %v83, %v86
    %v106 = vsel %vm96, %v92, 1326507024
    %v107 = vsel %vm95, %v89, %v106
    %v108 = vsel %vm94, %v105, %v107
    %v109 = vshll.u32 %v69, 8
    %v110 = vmul.u32.u64.compose %v109, %v108
    %v111 = vextract.low.u32 %v110
    %v112 = vextract.high.u32 %v110
    %v113 = vmul.u32.u64.compose %v109, %v104
    %v114 = vextract.low.u32 %v113
    %v115 = vextract.high.u32 %v113
    %v116 = vmul.u32 %v109, %v100
    %v117 = vadd.s32 %v112, %v114
    %vm118 = vc.u32 %v112, %v114
    %v119 = vadd.s32 %v115, 1
    %v120 = vsel %vm118, %v119, %v115
    %v121 = vadd.s32 %v116, %v120
    %v122 = vadd.s32 %v121, 536870912
    %v123 = vshrl.u32 %v122, 30
    %v124 = vshll.u32 %v123, 30
    %v125 = vsub.s32 %v121, %v124
    %vm126 = vcmp.lt.s32.totalorder %v125, 0
    %v127 = vsub.s32 0, %v125
    %v128 = vsel %vm126, %v127, %v125
    %v129 = vclz %v128
    %v130 = vsub.s32 %v129, 2
    %vm131 = vcmp.gt.s32.totalorder 0, %v130
    %v132 = vsel %vm131, 0, %v130
    %v133 = vsub.s32 32, %v132
    %v134 = vshll.u32 %v125, %v132
    %v135 = vshrl.u32 %v117, %v133
    %v136 = vor.u32 %v134, %v135
    %v137 = vsub.s32 4294967266, %v132
    %v138 = vadd.s32 %v137, 127
    %v139 = vshll.u32 %v138, 23
    %v140 = vor.u32 4788187, %v139
    %v141 = vand.u32 2147483647, %v140
    %v143 = vcvt.s32.f32 %v136
    %v144 = vmul.f32 %v143, %v141
    %v145 = vxor.u32 %v144, 2147483648
    %v146 = vsel %vm63, %v145, %v144
    %v147 = vsub.s32 4, %v123
    %v148 = vsel %vm63, %v147, %v123
    %v149 = vsel %vm62, %v60, %v146
    %v150 = vsel %vm62, 0, %v148
    %v151 = vcosq.f32.pop %v149
    %v152 = vsinq.f32.pop %v149
    %vm153 = vweird.f32 %v60
    %v154 = vadd.s32 %v150, 3
    %v155 = vand.u32 %v154, 3
    %vm156 = vcmp.lt.s32.totalorder %v155, 2
    %vm157 = vcmp.eq.s32.totalorder %v155, 0
    %v158 = vxor.u32 %v152, 2147483648
    %v159 = vsel %vm157, %v151, %v158
    %vm160 = vcmp.eq.s32.totalorder %v155, 2
    %v161 = vxor.u32 %v151, 2147483648
    %v162 = vsel %vm160, %v161, %v152
    %v163 = vsel %vm156, %v159, %v162
    %v164 = vsel %vm153, nan, %v163
    %v165 = vand.u32 2147483647, %v60
    %vm166 = vcmp.le.f32.partialorder %v165, 0.7853982
    %vm167 = vcmp.lt.s32.totalorder %v60, 0
    %v168 = vand.u32 %v60, 2139095040
    %v169 = vshrl.u32 %v168, 23
    %v170 = vsub.s32 %v169, 127
    %v171 = vand.u32 2147483647, %v60
    %v172 = vand.u32 %v171, 8388607
    %v173 = vor.u32 %v172, 8388608
    %v174 = vsub.s32 0, %v173
    %v175 = vadd.s32 %v170, 1
    %vm176 = vcmp.gt.s32.totalorder %v175, 0
    %v177 = vsel %vm176, %v175, 0
    %v178 = vshrl.u32 %v177, 5
    %v179 = vand.u32 %v177, 31
    %v180 = vsub.s32 32, %v179
    %v181 = vshrl.u32 683565275, %v180
    %v182 = vshll.u32 683565275, %v179
    %v183 = vshrl.u32 2475754826, %v180
    %v184 = vor.u32 %v182, %v183
    %v185 = vshll.u32 2475754826, %v179
    %v186 = vshrl.u32 2131351028, %v180
    %v187 = vor.u32 %v185, %v186
    %v188 = vshll.u32 2131351028, %v179
    %v189 = vshrl.u32 2102212464, %v180
    %v190 = vor.u32 %v188, %v189
    %v191 = vshll.u32 2102212464, %v179
    %v192 = vshrl.u32 920167782, %v180
    %v193 = vor.u32 %v191, %v192
    %v194 = vshll.u32 920167782, %v179
    %v195 = vshrl.u32 1326507024, %v180
    %v196 = vor.u32 %v194, %v195
    %vm197 = vcmp.lt.s32.totalorder %v178, 1
    %vm198 = vcmp.lt.s32.totalorder %v178, 2
    %vm199 = vcmp.lt.s32.totalorder %v178, 3
    %vm200 = vcmp.lt.s32.totalorder %v178, 4
    %v201 = vsel %vm197, %v181, %v184
    %v202 = vsel %vm200, %v190, 2102212464
    %v203 = vsel %vm199, %v187, %v202
    %v204 = vsel %vm198, %v201, %v203
    %v205 = vsel %vm197, %v184, %v187
    %v206 = vsel %vm200, %v193, 920167782
    %v207 = vsel %vm199, %v190, %v206
    %v208 = vsel %vm198, %v205, %v207
    %v209 = vsel %vm197, %v187, %v190
    %v210 = vsel %vm200, %v196, 1326507024
    %v211 = vsel %vm199, %v193, %v210
    %v212 = vsel %vm198, %v209, %v211
    %v213 = vshll.u32 %v173, 8
    %v214 = vmul.u32.u64.compose %v213, %v212
    %v215 = vextract.low.u32 %v214
    %v216 = vextract.high.u32 %v214
    %v217 = vmul.u32.u64.compose %v213, %v208
    %v218 = vextract.low.u32 %v217
    %v219 = vextract.high.u32 %v217
    %v220 = vmul.u32 %v213, %v204
    %v221 = vadd.s32 %v216, %v218
    %vm222 = vc.u32 %v216, %v218
    %v223 = vadd.s32 %v219, 1
    %v224 = vsel %vm222, %v223, %v219
    %v225 = vadd.s32 %v220, %v224
    %v226 = vadd.s32 %v225, 536870912
    %v227 = vshrl.u32 %v226, 30
    %v228 = vshll.u32 %v227, 30
    %v229 = vsub.s32 %v225, %v228
    %vm230 = vcmp.lt.s32.totalorder %v229, 0
    %v231 = vsub.s32 0, %v229
    %v232 = vsel %vm230, %v231, %v229
    %v233 = vclz %v232
    %v234 = vsub.s32 %v233, 2
    %vm235 = vcmp.gt.s32.totalorder 0, %v234
    %v236 = vsel %vm235, 0, %v234
    %v237 = vsub.s32 32, %v236
    %v238 = vshll.u32 %v229, %v236
    %v239 = vshrl.u32 %v221, %v237
    %v240 = vor.u32 %v238, %v239
    %v241 = vsub.s32 4294967266, %v236
    %v242 = vadd.s32 %v241, 127
    %v243 = vshll.u32 %v242, 23
    %v244 = vor.u32 4788187, %v243
    %v245 = vand.u32 2147483647, %v244
    %v247 = vcvt.s32.f32 %v240
    %v248 = vmul.f32 %v247, %v245
    %v249 = vxor.u32 %v248, 2147483648
    %v250 = vsel %vm167, %v249, %v248
    %v251 = vsub.s32 4, %v227
    %v252 = vsel %vm167, %v251, %v227
    %v253 = vsel %vm166, %v60, %v250
    %v254 = vsel %vm166, 0, %v252
    %v255 = vcosq.f32.pop %v253
    %v256 = vsinq.f32.pop %v253
    %vm257 = vweird.f32 %v60
    %v258 = vand.u32 %v254, 3
    %vm259 = vcmp.lt.s32.totalorder %v258, 2
    %vm260 = vcmp.eq.s32.totalorder %v258, 0
    %v261 = vxor.u32 %v256, 2147483648
    %v262 = vsel %vm260, %v255, %v261
    %vm263 = vcmp.eq.s32.totalorder %v258, 2
    %v264 = vxor.u32 %v255, 2147483648
    %v265 = vsel %vm263, %v264, %v256
    %v266 = vsel %vm259, %v262, %v265
    %v267 = vsel %vm257, nan, %v266
    %v268 = vld [vmem:[%s2] sm:$0xff]
    %v269 = vld [vmem:[%s2 + $0x8] sm:$0xff]
    %v270 = vld [vmem:[%s2 + $0x10] sm:$0xff]
    %v271 = vld [vmem:[%s2 + $0x18] sm:$0xff]
    %v272 = vld [vmem:[%s2 + $0x20] sm:$0xff]
    %v273 = vld [vmem:[%s2 + $0x28] sm:$0xff]
    %v274 = vld [vmem:[%s2 + $0x30] sm:$0xff]
    %v275 = vlaneseq
    %v276 = vshrl.u32 %v275, 7
    %v277 = vsub.s32 0, %v276
    %v278 = vrot.slane %v274, %v277
    %v279 = vmul.f32 %v51, %v278
    %vm280 = vcmask 392192
    %v281 = vsel %vm280, %v32, 0
    %283 = vmatprep.subr.mxu0 0.0
    %284 = vmatpush1.msra.mxu0 0.0
    %285 = vmatprep.subr.mxu0 0.0
    %286 = vmatpush1.msra.mxu0 0.0
    %287 = vmatprep.subr.mxu0 0.0
    %288 = vmatpush1.msra.mxu0 0.0
    %289 = vmatprep.subr.mxu0 0.0
    %290 = vmatpush1.msra.mxu0 0.0
    %291 = vmatprep.subr.mxu0 0.0
    %292 = vmatpush1.msra.mxu0 0.0
    %293 = vmatprep.subr.mxu0 0.0
    %294 = vmatpush1.msra.mxu0 0.0
    %295 = vmatprep.subr.mxu0 0.0
    %296 = vmatpush1.msra.mxu0 0.0
    %297 = vmatprep.subr.mxu0 0.0
    %298 = vmatpush1.msra.mxu0 0.0
    %299 = vmatprep.subr.mxu0 0.0
    %300 = vmatpush1.msra.mxu0 0.0
    %301 = vmatprep.subr.mxu0 0.0
    %302 = vmatpush1.msra.mxu0 0.0
    %303 = vmatprep.subr.mxu0 0.0
    %304 = vmatpush1.msra.mxu0 %v273
    %305 = vmatprep.subr.mxu0 0.0
    %306 = vmatpush1.msra.mxu0 %v272
    %307 = vmatprep.subr.mxu0 0.0
    %308 = vmatpush1.msra.mxu0 %v271
    %309 = vmatprep.subr.mxu0 0.0
    %310 = vmatpush1.msra.mxu0 %v270
    %311 = vmatprep.subr.mxu0 0.0
    %312 = vmatpush1.msra.mxu0 %v269
    %313 = vmatprep.subr.mxu0 0.0
    %314 = vmatpush1.msra.mxu0 %v268
    %315 = vmatprep.subr.mxu0 0.0
    %316 = vmatpush2.msra.mxu0 0.0
    %317 = vmatprep.subr.mxu0 0.0
    %318 = vmatpush2.msra.mxu0 0.0
    %319 = vmatprep.subr.mxu0 0.0
    %320 = vmatpush2.msra.mxu0 0.0
    %321 = vmatprep.subr.mxu0 0.0
    %322 = vmatpush2.msra.mxu0 0.0
    %323 = vmatprep.subr.mxu0 0.0
    %324 = vmatpush2.msra.mxu0 0.0
    %325 = vmatprep.subr.mxu0 0.0
    %326 = vmatpush2.msra.mxu0 0.0
    %327 = vmatprep.subr.mxu0 0.0
    %328 = vmatpush2.msra.mxu0 0.0
    %329 = vmatprep.subr.mxu0 0.0
    %330 = vmatpush2.msra.mxu0 0.0
    %331 = vmatprep.subr.mxu0 0.0
    %332 = vmatpush2.msra.mxu0 0.0
    %333 = vmatprep.subr.mxu0 0.0
    %334 = vmatpush2.msra.mxu0 0.0
    %335 = vmatprep.subr.mxu0 0.0
    %336 = vmatpush2.msra.mxu0 0.0
    %337 = vmatprep.subr.mxu0 0.0
    %338 = vmatpush2.msra.mxu0 0.0
    %339 = vmatprep.subr.mxu0 0.0
    %340 = vmatpush2.msra.mxu0 0.0
    %341 = vmatprep.subr.mxu0 0.0
    %342 = vmatpush2.msra.mxu0 0.0
    %343 = vmatprep.subr.mxu0 0.0
    %344 = vmatpush2.msra.mxu0 0.0
    %345 = vmatprep.subr.mxu0 0.0
    %346 = vmatpush2.msra.mxu0 0.0
    %347 = vmatprep.mubr.f32.mxu0 0.0
    %348 = vmatmul.mubr.f32.gmra.mxu0 %v281
    %v349 = vpop.f32.mrf.mxu0
    %v350 = vadd.f32 %v279, %v349
    %v351 = vpop.f32.mrf.mxu0
    %352 = vdwg.mxu0
    %354 = vset.pattern.permute.xlu0 39
    %355 = vperm.xlu0 %354, %v164
    %v356 = vpop.permute.xlu0 %355
    %v358 = vlaneseq
    %v359 = vshrl.u32 %v358, 7
    %v360 = vsub.s32 1, %v359
    %v361 = vrot.slane %v274, %v360
    %v362 = vmul.f32 %v356, %v361
    %v363 = vadd.f32 %v350, %v362
    %365 = vset.pattern.permute.xlu0 39
    %366 = vperm.xlu0 %365, %v267
    %v367 = vpop.permute.xlu0 %366
    %v369 = vlaneseq
    %v370 = vshrl.u32 %v369, 7
    %v371 = vsub.s32 2, %v370
    %v372 = vrot.slane %v274, %v371
    %v373 = vmul.f32 %v367, %v372
    %v374 = vadd.f32 %v363, %v373
    %v375 = vlaneseq
    %v376 = vshrl.u32 %v375, 7
    %v377 = vsub.s32 3, %v376
    %v378 = vrot.slane %v274, %v377
    %v379 = vadd.f32 %v374, %v378
    %v380 = vtanh.pop %v379
    %v381 = vld [vmem:[%s2 + $0x38] sm:$0xff]
    %v382 = vld [vmem:[%s2 + $0x40] sm:$0xff]
    %v383 = vld [vmem:[%s2 + $0x48] sm:$0xff]
    %v384 = vld [vmem:[%s2 + $0x50] sm:$0xff]
    %v385 = vld [vmem:[%s2 + $0x58] sm:$0xff]
    %v386 = vld [vmem:[%s2 + $0x60] sm:$0xff]
    %v387 = vld [vmem:[%s2 + $0x68] sm:$0xff]
    %v388 = vld [vmem:[%s2 + $0x70] sm:$0xff]
    %v389 = vld [vmem:[%s2 + $0x78] sm:$0x1]
    %v390 = vlaneseq
    %v391 = vshrl.u32 %v390, 7
    %v392 = vsub.s32 0, %v391
    %v393 = vrot.slane %v389, %v392
    %vm394 = vcmask 523264
    %v396 = vsel %vm394, %v380, 0
    %398 = vmatprep.subr.mxu0 0.0
    %399 = vmatpush1.msra.mxu0 0.0
    %400 = vmatprep.subr.mxu0 0.0
    %401 = vmatpush1.msra.mxu0 0.0
    %402 = vmatprep.subr.mxu0 0.0
    %403 = vmatpush1.msra.mxu0 0.0
    %404 = vmatprep.subr.mxu0 0.0
    %405 = vmatpush1.msra.mxu0 0.0
    %406 = vmatprep.subr.mxu0 0.0
    %407 = vmatpush1.msra.mxu0 0.0
    %408 = vmatprep.subr.mxu0 0.0
    %409 = vmatpush1.msra.mxu0 0.0
    %410 = vmatprep.subr.mxu0 0.0
    %411 = vmatpush1.msra.mxu0 0.0
    %412 = vmatprep.subr.mxu0 0.0
    %413 = vmatpush1.msra.mxu0 0.0
    %414 = vmatprep.subr.mxu0 0.0
    %415 = vmatpush1.msra.mxu0 %v388
    %416 = vmatprep.subr.mxu0 0.0
    %417 = vmatpush1.msra.mxu0 %v387
    %418 = vmatprep.subr.mxu0 0.0
    %419 = vmatpush1.msra.mxu0 %v386
    %420 = vmatprep.subr.mxu0 0.0
    %421 = vmatpush1.msra.mxu0 %v385
    %422 = vmatprep.subr.mxu0 0.0
    %423 = vmatpush1.msra.mxu0 %v384
    %424 = vmatprep.subr.mxu0 0.0
    %425 = vmatpush1.msra.mxu0 %v383
    %426 = vmatprep.subr.mxu0 0.0
    %427 = vmatpush1.msra.mxu0 %v382
    %428 = vmatprep.subr.mxu0 0.0
    %429 = vmatpush1.msra.mxu0 %v381
    %430 = vmatprep.subr.mxu0 0.0
    %431 = vmatpush2.msra.mxu0 0.0
    %432 = vmatprep.subr.mxu0 0.0
    %433 = vmatpush2.msra.mxu0 0.0
    %434 = vmatprep.subr.mxu0 0.0
    %435 = vmatpush2.msra.mxu0 0.0
    %436 = vmatprep.subr.mxu0 0.0
    %437 = vmatpush2.msra.mxu0 0.0
    %438 = vmatprep.subr.mxu0 0.0
    %439 = vmatpush2.msra.mxu0 0.0
    %440 = vmatprep.subr.mxu0 0.0
    %441 = vmatpush2.msra.mxu0 0.0
    %442 = vmatprep.subr.mxu0 0.0
    %443 = vmatpush2.msra.mxu0 0.0
    %444 = vmatprep.subr.mxu0 0.0
    %445 = vmatpush2.msra.mxu0 0.0
    %446 = vmatprep.subr.mxu0 0.0
    %447 = vmatpush2.msra.mxu0 0.0
    %448 = vmatprep.subr.mxu0 0.0
    %449 = vmatpush2.msra.mxu0 0.0
    %450 = vmatprep.subr.mxu0 0.0
    %451 = vmatpush2.msra.mxu0 0.0
    %452 = vmatprep.subr.mxu0 0.0
    %453 = vmatpush2.msra.mxu0 0.0
    %454 = vmatprep.subr.mxu0 0.0
    %455 = vmatpush2.msra.mxu0 0.0
    %456 = vmatprep.subr.mxu0 0.0
    %457 = vmatpush2.msra.mxu0 0.0
    %458 = vmatprep.subr.mxu0 0.0
    %459 = vmatpush2.msra.mxu0 0.0
    %460 = vmatprep.subr.mxu0 0.0
    %461 = vmatpush2.msra.mxu0 0.0
    %462 = vmatprep.mubr.f32.mxu0 0.0
    %463 = vmatmul.mubr.f32.gmra.mxu0 %v396
    %v464 = vpop.f32.mrf.mxu0
    %v465 = vadd.f32 %v393, %v464
    %v466 = vpop.f32.mrf.mxu0
    %467 = vdwg.mxu0
    %v468 = vstv %s31
    %v469 = vmul.f32 %v468, %v32
    %v470 = vadd.f32 %v465, %v469
    %vm471 = vcmask 261120
    %472 = vst.msk [vmem:[#allocation5] sm:$0xff] %vm471, %v470
    // Predicated region
    $region18: #{tpu_custom_call.1} parent=1 // pred_check
      _
    $region19: #{tpu_custom_call.1} parent=1 // pred_check_branch
      %474 = sbr.rel (0) target = $region21
    $region20: #{tpu_custom_call.1} parent=1 // pred_region
      %s476 = ssub.s32 128, 128
      %477 = vsyncadd [#allocation3], %s476
      %s479 = sshll.u32 [#allocation5], 4
      %s480 = int_to_ptr.vmem [resolvable:$true] %s479
      %482 = dma.vmem_to_hbm [thread:$0]  %s480, 128, %s3, [#allocation3]
    $region21: #{tpu_custom_call.1} parent=1 // pred_fallthru
      _
    // Predicated region
    $region22: #{tpu_custom_call.1} parent=1 // pred_check
      _
    $region23: #{tpu_custom_call.1} parent=1 // pred_check_branch
      %484 = sbr.rel (0) target = $region25
    $region24: #{tpu_custom_call.1} parent=1 // pred_region
      %485 = dma.done [#allocation3], 128
    $region25: #{tpu_custom_call.1} parent=1 // pred_fallthru
      _
    %486 = vsyncpa [#allocation3], 1
    %487 = vsyncpa [#allocation4], 1

</llo_original>
